<compile_context>
chip_gen: v7x
topology: tpu7x:2x2x1
jax: 0.10.0
libtpu: 0.0.40
codegen_flags: <defaults>
</compile_context>

<pallas_src>
import functools

import jax
import jax.numpy as jnp
from jax import lax
from jax.experimental import pallas as pl
from jax.experimental.pallas import tpu as pltpu


def _masked_mean_kernel(h_ref, m_ref, o_ref, num_acc, den_acc, *,
                        seq_len, seq_tile, guard_seq):
    # h_ref:   (TB, TS, D)   hidden-states block (input dtype)
    # m_ref:   (TB, 1, TS)   lane-dense 0/1 mask block (input dtype)
    # o_ref:   (TB, 1, D)    pooled output block (written on the last seq step)
    # num_acc: (TB, 1, D) f32  running masked sum
    # den_acc: (TB, 1, 1) f32  running mask count
    s_idx = pl.program_id(1)

    @pl.when(s_idx == 0)
    def _init():
        num_acc[...] = jnp.zeros_like(num_acc)
        den_acc[...] = jnp.zeros_like(den_acc)

    h = h_ref[...]
    m = m_ref[...]
    if guard_seq:
        # The last sequence block reads past S; zero both the mask and the
        # hidden values there so stale-VMEM garbage (possibly NaN/Inf) cannot
        # leak into valid rows.  Statically omitted when seq tiling is exact.
        s_rem = seq_len - s_idx * seq_tile
        m = jnp.where(lax.broadcasted_iota(jnp.int32, m.shape, 2) < s_rem,
                      m, jnp.zeros_like(m))
        h = jnp.where(lax.broadcasted_iota(jnp.int32, h.shape, 1) < s_rem,
                      h, jnp.zeros_like(h))

    # Masked sum over the sequence as a batched (1, TS) x (TS, D) contraction:
    # runs on the MXU, avoids the mask lane->sublane relayout and the
    # (TB, TS, D) VPU intermediate, and accumulates in f32.
    num_acc[...] += jnp.einsum("bks,bsd->bkd", m, h,
                               preferred_element_type=jnp.float32)
    den_acc[...] += jnp.sum(m, axis=2, keepdims=True, dtype=jnp.float32)

    @pl.when(s_idx == pl.num_programs(1) - 1)
    def _finalize():
        den = jnp.maximum(den_acc[...], jnp.float32(1e-9))  # all-masked row -> ~0
        # Multiply by (exact) reciprocal rather than dividing.
        o_ref[...] = (num_acc[...] * pl.reciprocal(den)).astype(o_ref.dtype)


def _cdiv(a, b):
    return -(-a // b)


def _round_up(x, m):
    return _cdiv(x, m) * m


def _pick_tile(total, step, cap):
    """Tile size for an axis of length `total`.

    Returns `total` itself if it fits under `cap` (full axis, no padding);
    otherwise the multiple of `step` (<= cap) minimising the padded extent
    cdiv(total, t) * t, preferring larger tiles (fewer grid steps) on ties.
    """
    cap = max(step, (cap // step) * step)
    if cap >= total:
        return total
    best_t, best_pad = step, _round_up(total, step)
    t = 2 * step
    while t <= cap:
        pad = _round_up(total, t)
        if pad < best_pad or (pad == best_pad and t > best_t):
            best_t, best_pad = t, pad
        t += step
    return best_t


def reprs_pooling(last_hidden_states, attention_mask, *,
                  block_bytes=None, vmem_limit_bytes=None):
    """Masked mean pooling.

    last_hidden_states: [B, S, D] float (f32 or bf16)
    attention_mask:     [B, S]    0/1 (any numeric / bool dtype)
    returns:            [B, D]    same dtype as last_hidden_states
    """
    B, S, D = last_hidden_states.shape
    dtype = last_hidden_states.dtype
    itemsize = jnp.dtype(dtype).itemsize
    sublane = 16 if itemsize == 2 else 8       # sublane packing (bf16 packs 2x)
    d_lanes = _round_up(D, 128)                # lane padding of the hidden block

    # ---- generation-aware budgets (v5e/v6e: 128 MiB VMEM -> bigger blocks;
    # v7x: 64 MiB physical / 32 MiB scoped default -> keep 8 MiB blocks). -----
    if block_bytes is None or vmem_limit_bytes is None:
        try:
            vmem_cap = int(pltpu.get_tpu_info().vmem_capacity_bytes)
        except Exception:  # conservative fallback
            vmem_cap = 64 * 1024 * 1024
        if vmem_cap >= 96 * 1024 * 1024:       # v5e / v6e
            bb_def, vl_def = 16 * 1024 * 1024, 64 * 1024 * 1024
        else:                                  # v7x-like
            bb_def, vl_def = 8 * 1024 * 1024, 32 * 1024 * 1024
        block_bytes = bb_def if block_bytes is None else block_bytes
        vmem_limit_bytes = vl_def if vmem_limit_bytes is None else vmem_limit_bytes

    def hid_bytes(tb_, ts_):  # VMEM bytes of one hidden block incl. padding
        return tb_ * _round_up(ts_, sublane) * d_lanes * itemsize

    # ---- tile selection ------------------------------------------------------
    if hid_bytes(B, S) <= block_bytes:
        tb, ts = B, S                            # one grid step (contract shape)
    elif hid_bytes(min(B, 8), S) <= block_bytes:
        ts = S                                   # batch-only tiling, full sequence
        tb = _pick_tile(B, 8, block_bytes // hid_bytes(1, S))
    else:                                        # tile batch and sequence
        cap_b = block_bytes // (128 * d_lanes * itemsize)
        tb = B if B <= 8 else _pick_tile(B, 8, max(8, cap_b))
        cap_s = block_bytes // (tb * d_lanes * itemsize)
        ts = _pick_tile(S, 128, max(128, cap_s))

    grid = (_cdiv(B, tb), _cdiv(S, ts))
    guard_seq = grid[1] * ts != S                # last seq block reads past S

    # Ensure double-buffered blocks + accumulators fit the scoped VMEM limit
    # even when the 128-wide seq-tile floor overshoots block_bytes (wide D).
    mask_blk = tb * 8 * _round_up(ts, 128) * itemsize
    out_blk = tb * 8 * d_lanes * itemsize
    scratch = tb * 8 * d_lanes * 4 + tb * 8 * 128 * 4
    needed = 2 * hid_bytes(tb, ts) + 2 * mask_blk + 2 * out_blk + scratch + (2 << 20)
    vmem_limit_bytes = int(max(vmem_limit_bytes, needed))

    # Lane-dense [B, 1, S] mask in the hidden dtype (0/1 exact in bf16/f32),
    # already laid out for the batched MXU contraction (no in-kernel relayout).
    m3 = attention_mask.astype(dtype).reshape(B, 1, S)

    kernel = functools.partial(_masked_mean_kernel,
                               seq_len=S, seq_tile=ts, guard_seq=guard_seq)

    out = pl.pallas_call(
        kernel,
        out_shape=jax.ShapeDtypeStruct((B, 1, D), dtype),
        grid_spec=pltpu.PrefetchScalarGridSpec(
            num_scalar_prefetch=0,
            grid=grid,                           # (batch, seq) — reduction last
            in_specs=[
                pl.BlockSpec((tb, ts, D), lambda b, s: (b, s, 0)),
                pl.BlockSpec((tb, 1, ts), lambda b, s: (b, 0, s)),
            ],
            out_specs=pl.BlockSpec((tb, 1, D), lambda b, s: (b, 0, 0)),
            scratch_shapes=[
                pltpu.VMEM((tb, 1, D), jnp.float32),   # numerator accumulator
                pltpu.VMEM((tb, 1, 1), jnp.float32),   # denominator accumulator
            ],
        ),
        compiler_params=pltpu.CompilerParams(
            dimension_semantics=("parallel", "arbitrary"),
            vmem_limit_bytes=vmem_limit_bytes,
        ),
    )(last_hidden_states, m3)

    return out.reshape(B, D)


def _reference(last_hidden_states, attention_mask):
    m = attention_mask.astype(jnp.float32)[..., None]                # (B, S, 1)
    num = jnp.sum(last_hidden_states.astype(jnp.float32) * m, axis=1)
    den = jnp.maximum(jnp.sum(m, axis=1), 1e-9)
    return (num / den).astype(last_hidden_states.dtype)


if __name__ == "__main__":
    root_key = jax.random.PRNGKey(0)

    def check(B, S, D, **kw):
        kh, kl = jax.random.split(jax.random.fold_in(root_key, B * 100000 + S * 1000 + D))
        hidden = jax.random.normal(kh, (B, S, D), dtype=jnp.float32)
        lengths = jax.random.randint(kl, (B,), 1, S + 1)
        mask = (jnp.arange(S)[None, :] < lengths[:, None]).astype(jnp.int32)

        out = jax.block_until_ready(reprs_pooling(hidden, mask, **kw))
        ref = _reference(hidden, mask)
        assert out.shape == (B, D), out.shape
        # Tolerance sized so it also covers reduced-precision MXU f32 passes on
        # some generations; still tight enough to catch masking / tiling bugs
        # (those produce O(0.1+) errors).
        assert jnp.allclose(out, ref, atol=2e-3, rtol=1e-2), f"mismatch at {(B, S, D)}"

    # Tiny smoke test (single grid step).
    check(2, 8, 32)
    # The module's stated contract shape: collapses to grid (1, 1).
    check(16, 9, 768)
    # Batch-only tiling with a partial (clipped) last batch block.
    check(20, 64, 256, block_bytes=1 * 1024 * 1024)
    # Batch + sequence tiling, accumulators over 3 seq steps, in-kernel OOB
    # sequence guard (S=300 not a multiple of the 128-wide seq tile).
    check(10, 300, 256, block_bytes=256 * 1024)

    print("KERNEL_OK")
</pallas_src>

<mosaic_0001>
module attributes {stable_mosaic.version = 11 : i64} {
  func.func @_masked_mean_kernel(%arg0: i32, %arg1: i32, %arg2: memref<2x8x32xf32, #tpu.memory_space<vmem>>, %arg3: memref<2x1x8xf32, #tpu.memory_space<vmem>>, %arg4: memref<2x1x32xf32, #tpu.memory_space<vmem>>, %arg5: memref<2x1x32xf32, #tpu.memory_space<vmem>>, %arg6: memref<2x1x1xf32, #tpu.memory_space<vmem>>) attributes {dimension_semantics = [#tpu.dimension_semantics<parallel>, #tpu.dimension_semantics<arbitrary>], iteration_bounds = array<i64: 1, 1>, scalar_prefetch = 0 : i64, scratch_operands = 2 : i64, tpu.core_type = #tpu.core_type<tc>, window_params = [{transform_indices = @transform_0, window_bounds = array<i64: 2, 8, 32>}, {transform_indices = @transform_1, window_bounds = array<i64: 2, 1, 8>}, {transform_indices = @transform_2, window_bounds = array<i64: 2, 1, 32>}]} {
    %c0_i32 = arith.constant 0 : i32
    %0 = arith.cmpi eq, %arg1, %c0_i32 : i32
    %1 = arith.extui %0 : i1 to i32
    %c0_i32_0 = arith.constant 0 : i32
    %2 = arith.cmpi ne, %1, %c0_i32_0 : i32
    scf.if %2 {
      %cst_21 = arith.constant 0.000000e+00 : f32
      %17 = vector.broadcast %cst_21 : f32 to vector<2x1x32xf32>
      %c0_22 = arith.constant 0 : index
      %c0_23 = arith.constant 0 : index
      %c0_24 = arith.constant 0 : index
      %18 = vector.load %arg5[%c0_22, %c0_23, %c0_24] : memref<2x1x32xf32, #tpu.memory_space<vmem>>, vector<2x1x32xf32>
      tpu.vector_store %arg5[%c0_22, %c0_23, %c0_24], %17 {strides = array<i32>} : memref<2x1x32xf32, #tpu.memory_space<vmem>>, vector<2x1x32xf32>,
      %cst_25 = arith.constant 0.000000e+00 : f32
      %19 = vector.broadcast %cst_25 : f32 to vector<2x1x1xf32>
      %c0_26 = arith.constant 0 : index
      %c0_27 = arith.constant 0 : index
      %c0_28 = arith.constant 0 : index
      %20 = vector.load %arg6[%c0_26, %c0_27, %c0_28] : memref<2x1x1xf32, #tpu.memory_space<vmem>>, vector<2x1x1xf32>
      tpu.vector_store %arg6[%c0_26, %c0_27, %c0_28], %19 {strides = array<i32>} : memref<2x1x1xf32, #tpu.memory_space<vmem>>, vector<2x1x1xf32>,
    } else {
    }
    %c0 = arith.constant 0 : index
    %c0_1 = arith.constant 0 : index
    %c0_2 = arith.constant 0 : index
    %3 = vector.load %arg2[%c0, %c0_1, %c0_2] : memref<2x8x32xf32, #tpu.memory_space<vmem>>, vector<2x8x32xf32>
    %c0_3 = arith.constant 0 : index
    %c0_4 = arith.constant 0 : index
    %c0_5 = arith.constant 0 : index
    %4 = vector.load %arg3[%c0_3, %c0_4, %c0_5] : memref<2x1x8xf32, #tpu.memory_space<vmem>>, vector<2x1x8xf32>
    %c0_6 = arith.constant 0 : index
    %c0_7 = arith.constant 0 : index
    %c0_8 = arith.constant 0 : index
    %5 = vector.load %arg5[%c0_6, %c0_7, %c0_8] : memref<2x1x32xf32, #tpu.memory_space<vmem>>, vector<2x1x32xf32>
    "tpu.trace_start"() <{level = 10 : i32, message = "bks,bsd->bkd"}> : () -> ()
    %cst = arith.constant dense<0.000000e+00> : vector<2x1x32xf32>
    %6 = tpu.matmul %4, %3, %cst {dimension_numbers = #tpu.dot_dimension_numbers<[2], [1], [1], [2], [0, 0, 0, 1, 1, 2], [0], [0]>} : vector<2x1x8xf32>, vector<2x8x32xf32>, vector<2x1x32xf32> -> vector<2x1x32xf32>
    "tpu.trace_stop"() : () -> ()
    %7 = arith.addf %5, %6 : vector<2x1x32xf32>
    %c0_9 = arith.constant 0 : index
    %c0_10 = arith.constant 0 : index
    %c0_11 = arith.constant 0 : index
    %8 = vector.load %arg5[%c0_9, %c0_10, %c0_11] : memref<2x1x32xf32, #tpu.memory_space<vmem>>, vector<2x1x32xf32>
    tpu.vector_store %arg5[%c0_9, %c0_10, %c0_11], %7 {strides = array<i32>} : memref<2x1x32xf32, #tpu.memory_space<vmem>>, vector<2x1x32xf32>,
    %c0_12 = arith.constant 0 : index
    %c0_13 = arith.constant 0 : index
    %c0_14 = arith.constant 0 : index
    %9 = vector.load %arg6[%c0_12, %c0_13, %c0_14] : memref<2x1x1xf32, #tpu.memory_space<vmem>>, vector<2x1x1xf32>
    %cst_15 = arith.constant dense<0.000000e+00> : vector<2x1xf32>
    %10 = vector.multi_reduction <add>, %4, %cst_15 [2] : vector<2x1x8xf32> to vector<2x1xf32>
    %11 = vector.shape_cast %10 : vector<2x1xf32> to vector<2x1x1xf32>
    %12 = arith.addf %9, %11 : vector<2x1x1xf32>
    %c0_16 = arith.constant 0 : index
    %c0_17 = arith.constant 0 : index
    %c0_18 = arith.constant 0 : index
    %13 = vector.load %arg6[%c0_16, %c0_17, %c0_18] : memref<2x1x1xf32, #tpu.memory_space<vmem>>, vector<2x1x1xf32>
    tpu.vector_store %arg6[%c0_16, %c0_17, %c0_18], %12 {strides = array<i32>} : memref<2x1x1xf32, #tpu.memory_space<vmem>>, vector<2x1x1xf32>,
    %c0_i32_19 = arith.constant 0 : i32
    %14 = arith.cmpi eq, %arg1, %c0_i32_19 : i32
    %15 = arith.extui %14 : i1 to i32
    %c0_i32_20 = arith.constant 0 : i32
    %16 = arith.cmpi ne, %15, %c0_i32_20 : i32
    scf.if %16 {
      %c0_21 = arith.constant 0 : index
      %c0_22 = arith.constant 0 : index
      %c0_23 = arith.constant 0 : index
      %17 = vector.load %arg6[%c0_21, %c0_22, %c0_23] : memref<2x1x1xf32, #tpu.memory_space<vmem>>, vector<2x1x1xf32>
      %cst_24 = arith.constant 9.99999971E-10 : f32
      %18 = vector.broadcast %cst_24 : f32 to vector<2x1x1xf32>
      %19 = arith.maximumf %17, %18 : vector<2x1x1xf32>
      %c0_25 = arith.constant 0 : index
      %c0_26 = arith.constant 0 : index
      %c0_27 = arith.constant 0 : index
      %20 = vector.load %arg5[%c0_25, %c0_26, %c0_27] : memref<2x1x32xf32, #tpu.memory_space<vmem>>, vector<2x1x32xf32>
      %21 = tpu.reciprocal %19 : vector<2x1x1xf32> -> vector<2x1x1xf32>
      %22 = vector.broadcast %21 : vector<2x1x1xf32> to vector<2x1x32xf32>
      %23 = arith.mulf %20, %22 : vector<2x1x32xf32>
      %c0_28 = arith.constant 0 : index
      %c0_29 = arith.constant 0 : index
      %c0_30 = arith.constant 0 : index
      %24 = vector.load %arg4[%c0_28, %c0_29, %c0_30] : memref<2x1x32xf32, #tpu.memory_space<vmem>>, vector<2x1x32xf32>
      tpu.vector_store %arg4[%c0_28, %c0_29, %c0_30], %23 {strides = array<i32>} : memref<2x1x32xf32, #tpu.memory_space<vmem>>, vector<2x1x32xf32>,
    } else {
    }
    return
  }
  func.func @transform_0(%arg0: i32, %arg1: i32) -> (i32, i32, i32) {
    %c0_i32 = arith.constant 0 : i32
    %c0_i32_0 = arith.constant 0 : i32
    return %arg0, %arg1, %c0_i32 : i32, i32, i32
  }
  func.func @transform_1(%arg0: i32, %arg1: i32) -> (i32, i32, i32) {
    %c0_i32 = arith.constant 0 : i32
    %c0_i32_0 = arith.constant 0 : i32
    return %arg0, %c0_i32, %arg1 : i32, i32, i32
  }
  func.func @transform_2(%arg0: i32, %arg1: i32) -> (i32, i32, i32) {
    %c0_i32 = arith.constant 0 : i32
    %c0_i32_0 = arith.constant 0 : i32
    %c0_i32_1 = arith.constant 0 : i32
    return %arg0, %c0_i32, %c0_i32_0 : i32, i32, i32
  }
}

</mosaic_0001>

<llo_original>
// kernel: tpu_custom_call.1
$region0: #{tpu_custom_call.1}
  #allocation0 [shape = 'u32[]', space=smem, size = 0x4, offset = 0x4, fixed_abs, tag = 'smem constant byte address 0x4 - core index']
  #allocation1 [shape = 'u32[144,128]{1,0:T(1,128)}', space=vmem, size = 0x12000, scoped, tag = 'internal scratch']
  #allocation2 [shape = 'f32[2,1,32]{2,1,0:T(1,128)}', space=vmem, size = 0x400, scoped, tag = 'scratch operand']
  #allocation3 [shape = 'f32[2,1,1]{2,1,0:T(1,128)}', space=vmem, size = 0x400, scoped, tag = 'scratch operand']
  %s0 = inlined_call_operand.hbm [shape: f32[2,8,32], index: 0, kind: input, shape index: {}]
  %s1 = inlined_call_operand.vmem [shape: f32[2,1,8], index: 1, kind: input, shape index: {}]
  %s2 = inlined_call_operand.hbm [shape: f32[2,1,32], index: 2, kind: output, shape index: {}]
  %s3 = sld [smem:[#allocation0]]
  $region30: #{tpu_custom_call.1} parent=0
    _
  %s5 = ssub.s32 1, %s3
  %s6 = scalar_select 0, %s5, %s3
  $region1: #{tpu_custom_call.1} parent=0
    #allocation4 [shape = 'u8[8192]{0}', space=vmem, size = 0x2000, scoped, tag = 'input window, operand 0, single buffered']
    #allocation5 [shape = 's32[1]{0}', space=sflag, size = 0x4, scoped, tag = 'scoped memory for tpu_custom_call.1']
    #allocation6 [shape = 's32[1]{0}', space=sflag, size = 0x4, scoped, tag = 'scoped memory for tpu_custom_call.1']
    #allocation7 [shape = 'u8[1024]{0}', space=vmem, size = 0x400, scoped, tag = 'output window, operand 0, single buffered']
    %7 = vsyncpa [#allocation5], 0
    %8 = vsyncpa [#allocation6], 0
    // Predicated region
    $region2: #{tpu_custom_call.1} parent=1 // pred_check
      _
    $region3: #{tpu_custom_call.1} parent=1 // pred_check_branch
      %10 = sbr.rel (0) target = $region5
    $region4: #{tpu_custom_call.1} parent=1 // pred_region
      %s12 = ssub.s32 256, 256
      %13 = vsyncadd [#allocation5], %s12
      %s14 = sshll.u32 [#allocation4], 4
      %s15 = int_to_ptr.vmem [resolvable:$true] %s14
      %20 = dma.hbm_to_vmem [thread:$0]  %s0, 256, %s15, [#allocation5], 128, 128, 8
    $region5: #{tpu_custom_call.1} parent=1 // pred_fallthru
      _
    // Predicated region
    $region6: #{tpu_custom_call.1} parent=1 // pred_check
      _
    $region7: #{tpu_custom_call.1} parent=1 // pred_check_branch
      %22 = sbr.rel (0) target = $region9
    $region8: #{tpu_custom_call.1} parent=1 // pred_region
      _
    $region9: #{tpu_custom_call.1} parent=1 // pred_fallthru
      _
    // Predicated region
    $region10: #{tpu_custom_call.1} parent=1 // pred_check
      _
    $region11: #{tpu_custom_call.1} parent=1 // pred_check_branch
      %24 = sbr.rel (0) target = $region13
    $region12: #{tpu_custom_call.1} parent=1 // pred_region
      %25 = dma.done [#allocation5], 256
    $region13: #{tpu_custom_call.1} parent=1 // pred_fallthru
      _
    %p26 = scmp.eq.s32.totalorder 0, 0
    // Predicated region
    $region14: #{tpu_custom_call.1} parent=1 // pred_check
      %p27 = pneg %p26
    $region15: #{tpu_custom_call.1} parent=1 // pred_check_branch
      %29 = sbr.rel (%p27) target = $region17
    $region16: #{tpu_custom_call.1} parent=1 // pred_region
      %vm30 = vcmask 253952
      %31 = vst.msk [vmem:[#allocation2] sm:$0x1] %vm30, 0.0
      %32 = vst.msk [vmem:[#allocation2 + $0x1] sm:$0x1] %vm30, 0.0
      %vm33 = vcmask 0
      %34 = vst.msk [vmem:[#allocation3] sm:$0x1] %vm33, 0.0
      %35 = vst.msk [vmem:[#allocation3 + $0x1] sm:$0x1] %vm33, 0.0
    $region17: #{tpu_custom_call.1} parent=1 // pred_fallthru
      _
    %v36 = vld [vmem:[#allocation4] sm:$0xff]
    %v37 = vld [vmem:[#allocation4 + $0x8] sm:$0xff]
    %v38 = vld [vmem:[%s1] sm:$0x1]
    %v39 = vld [vmem:[%s1 + $0x1] sm:$0x1]
    %v40 = vld [vmem:[#allocation2] sm:$0x1]
    %v41 = vld [vmem:[#allocation2 + $0x1] sm:$0x1]
    %vm42 = vcmask 64512
    %v44 = vsel %vm42, %v38, 0
    %46 = vmatprep.subr.mxu0 0.0
    %47 = vmatpush1.msra.mxu0 %v36
    %48 = vmatprep.subr.mxu0 0.0
    %49 = vmatpush1.msra.mxu0 0.0
    %50 = vmatprep.subr.mxu0 0.0
    %51 = vmatpush1.msra.mxu0 0.0
    %52 = vmatprep.subr.mxu0 0.0
    %53 = vmatpush1.msra.mxu0 0.0
    %54 = vmatprep.subr.mxu0 0.0
    %55 = vmatpush1.msra.mxu0 0.0
    %56 = vmatprep.subr.mxu0 0.0
    %57 = vmatpush1.msra.mxu0 0.0
    %58 = vmatprep.subr.mxu0 0.0
    %59 = vmatpush1.msra.mxu0 0.0
    %60 = vmatprep.subr.mxu0 0.0
    %61 = vmatpush1.msra.mxu0 0.0
    %62 = vmatprep.subr.mxu0 0.0
    %63 = vmatpush1.msra.mxu0 0.0
    %64 = vmatprep.subr.mxu0 0.0
    %65 = vmatpush1.msra.mxu0 0.0
    %66 = vmatprep.subr.mxu0 0.0
    %67 = vmatpush1.msra.mxu0 0.0
    %68 = vmatprep.subr.mxu0 0.0
    %69 = vmatpush1.msra.mxu0 0.0
    %70 = vmatprep.subr.mxu0 0.0
    %71 = vmatpush1.msra.mxu0 0.0
    %72 = vmatprep.subr.mxu0 0.0
    %73 = vmatpush1.msra.mxu0 0.0
    %74 = vmatprep.subr.mxu0 0.0
    %75 = vmatpush1.msra.mxu0 0.0
    %76 = vmatprep.subr.mxu0 0.0
    %77 = vmatpush1.msra.mxu0 0.0
    %78 = vmatprep.subr.mxu0 0.0
    %79 = vmatpush1.msra.mxu0 0.0
    %80 = vmatprep.subr.mxu0 0.0
    %81 = vmatpush1.msra.mxu0 0.0
    %82 = vmatprep.subr.mxu0 0.0
    %83 = vmatpush1.msra.mxu0 0.0
    %84 = vmatprep.subr.mxu0 0.0
    %85 = vmatpush1.msra.mxu0 0.0
    %86 = vmatprep.subr.mxu0 0.0
    %87 = vmatpush1.msra.mxu0 0.0
    %88 = vmatprep.subr.mxu0 0.0
    %89 = vmatpush1.msra.mxu0 0.0
    %90 = vmatprep.subr.mxu0 0.0
    %91 = vmatpush1.msra.mxu0 0.0
    %92 = vmatprep.subr.mxu0 0.0
    %93 = vmatpush1.msra.mxu0 0.0
    %94 = vmatprep.subr.mxu0 0.0
    %95 = vmatpush1.msra.mxu0 0.0
    %96 = vmatprep.subr.mxu0 0.0
    %97 = vmatpush1.msra.mxu0 0.0
    %98 = vmatprep.subr.mxu0 0.0
    %99 = vmatpush1.msra.mxu0 0.0
    %100 = vmatprep.subr.mxu0 0.0
    %101 = vmatpush1.msra.mxu0 0.0
    %102 = vmatprep.subr.mxu0 0.0
    %103 = vmatpush1.msra.mxu0 0.0
    %104 = vmatprep.subr.mxu0 0.0
    %105 = vmatpush1.msra.mxu0 0.0
    %106 = vmatprep.subr.mxu0 0.0
    %107 = vmatpush1.msra.mxu0 0.0
    %108 = vmatprep.subr.mxu0 0.0
    %109 = vmatpush1.msra.mxu0 0.0
    %110 = vmatprep.mubr.f32.mxu0 0.0
    %111 = vmatmul.mubr.f32.gmra.mrb[0].mxu0 %v44
    %v112 = vpop.f32.mrb[0].mxu0
    %v113 = vadd.f32 0.0, %v112
    %v114 = vpop.f32.mrb[0].mxu0
    %115 = vdwg.mxu0
    %v117 = vsel %vm42, %v39, 0
    %119 = vmatprep.subr.mxu0 0.0
    %120 = vmatpush1.msra.mxu0 %v37
    %121 = vmatprep.subr.mxu0 0.0
    %122 = vmatpush1.msra.mxu0 0.0
    %123 = vmatprep.subr.mxu0 0.0
    %124 = vmatpush1.msra.mxu0 0.0
    %125 = vmatprep.subr.mxu0 0.0
    %126 = vmatpush1.msra.mxu0 0.0
    %127 = vmatprep.subr.mxu0 0.0
    %128 = vmatpush1.msra.mxu0 0.0
    %129 = vmatprep.subr.mxu0 0.0
    %130 = vmatpush1.msra.mxu0 0.0
    %131 = vmatprep.subr.mxu0 0.0
    %132 = vmatpush1.msra.mxu0 0.0
    %133 = vmatprep.subr.mxu0 0.0
    %134 = vmatpush1.msra.mxu0 0.0
    %135 = vmatprep.subr.mxu0 0.0
    %136 = vmatpush1.msra.mxu0 0.0
    %137 = vmatprep.subr.mxu0 0.0
    %138 = vmatpush1.msra.mxu0 0.0
    %139 = vmatprep.subr.mxu0 0.0
    %140 = vmatpush1.msra.mxu0 0.0
    %141 = vmatprep.subr.mxu0 0.0
    %142 = vmatpush1.msra.mxu0 0.0
    %143 = vmatprep.subr.mxu0 0.0
    %144 = vmatpush1.msra.mxu0 0.0
    %145 = vmatprep.subr.mxu0 0.0
    %146 = vmatpush1.msra.mxu0 0.0
    %147 = vmatprep.subr.mxu0 0.0
    %148 = vmatpush1.msra.mxu0 0.0
    %149 = vmatprep.subr.mxu0 0.0
    %150 = vmatpush1.msra.mxu0 0.0
    %151 = vmatprep.subr.mxu0 0.0
    %152 = vmatpush1.msra.mxu0 0.0
    %153 = vmatprep.subr.mxu0 0.0
    %154 = vmatpush1.msra.mxu0 0.0
    %155 = vmatprep.subr.mxu0 0.0
    %156 = vmatpush1.msra.mxu0 0.0
    %157 = vmatprep.subr.mxu0 0.0
    %158 = vmatpush1.msra.mxu0 0.0
    %159 = vmatprep.subr.mxu0 0.0
    %160 = vmatpush1.msra.mxu0 0.0
    %161 = vmatprep.subr.mxu0 0.0
    %162 = vmatpush1.msra.mxu0 0.0
    %163 = vmatprep.subr.mxu0 0.0
    %164 = vmatpush1.msra.mxu0 0.0
    %165 = vmatprep.subr.mxu0 0.0
    %166 = vmatpush1.msra.mxu0 0.0
    %167 = vmatprep.subr.mxu0 0.0
    %168 = vmatpush1.msra.mxu0 0.0
    %169 = vmatprep.subr.mxu0 0.0
    %170 = vmatpush1.msra.mxu0 0.0
    %171 = vmatprep.subr.mxu0 0.0
    %172 = vmatpush1.msra.mxu0 0.0
    %173 = vmatprep.subr.mxu0 0.0
    %174 = vmatpush1.msra.mxu0 0.0
    %175 = vmatprep.subr.mxu0 0.0
    %176 = vmatpush1.msra.mxu0 0.0
    %177 = vmatprep.subr.mxu0 0.0
    %178 = vmatpush1.msra.mxu0 0.0
    %179 = vmatprep.subr.mxu0 0.0
    %180 = vmatpush1.msra.mxu0 0.0
    %181 = vmatprep.subr.mxu0 0.0
    %182 = vmatpush1.msra.mxu0 0.0
    %183 = vmatprep.mubr.f32.mxu0 0.0
    %184 = vmatmul.mubr.f32.gmra.mrb[0].mxu0 %v117
    %v185 = vpop.f32.mrb[0].mxu0
    %v186 = vadd.f32 0.0, %v185
    %v187 = vpop.f32.mrb[0].mxu0
    %188 = vdwg.mxu0
    %v189 = vadd.f32 %v40, %v113
    %v190 = vadd.f32 %v41, %v186
    %vm191 = vcmask 253952
    %192 = vst.msk [vmem:[#allocation2] sm:$0x1] %vm191, %v189
    %193 = vst.msk [vmem:[#allocation2 + $0x1] sm:$0x1] %vm191, %v190
    %v194 = vld [vmem:[#allocation3] sm:$0x1]
    %v195 = vld [vmem:[#allocation3 + $0x1] sm:$0x1]
    %vm196 = vcmask 57344
    %v197 = vsel %vm196, %v38, 0.0
    %198 = vadd.xlane.f32.xlu0 %v197
    %v199 = vpop.xlane.xlu0 %198
    %v200 = vsel %vm196, %v39, 0.0
    %201 = vadd.xlane.f32.xlu0 %v200
    %v202 = vpop.xlane.xlu0 %201
    %v203 = vadd.f32 %v194, %v199
    %v204 = vadd.f32 %v195, %v202
    %vm205 = vcmask 0
    %206 = vst.msk [vmem:[#allocation3] sm:$0x1] %vm205, %v203
    %207 = vst.msk [vmem:[#allocation3 + $0x1] sm:$0x1] %vm205, %v204
    // Predicated region
    $region18: #{tpu_custom_call.1} parent=1 // pred_check
      %p208 = pneg %p26
    $region19: #{tpu_custom_call.1} parent=1 // pred_check_branch
      %210 = sbr.rel (%p208) target = $region21
    $region20: #{tpu_custom_call.1} parent=1 // pred_region
      %v211 = vld [vmem:[#allocation3] sm:$0x1]
      %v212 = vld [vmem:[#allocation3 + $0x1] sm:$0x1]
      %v213 = vmax.f32 %v211, 1e-09
      %v214 = vmax.f32 %v212, 1e-09
      %v215 = vld [vmem:[#allocation2] sm:$0x1]
      %v216 = vld [vmem:[#allocation2 + $0x1] sm:$0x1]
      %v217 = vrcp.pop %v213
      %v218 = vrcp.pop %v214
      %220 = vset.pattern.permute.xlu0 0
      %221 = vperm.xlu0 %220, %v217
      %v222 = vpop.permute.xlu0 %221
      %v224 = vlaneseq
      %v225 = vshrl.u32 %v224, 7
      %v226 = vsub.s32 0, %v225
      %v227 = vrot.slane %v222, %v226
      %229 = vset.pattern.permute.xlu0 0
      %230 = vperm.xlu0 %229, %v218
      %v231 = vpop.permute.xlu0 %230
      %v233 = vlaneseq
      %v234 = vshrl.u32 %v233, 7
      %v235 = vsub.s32 0, %v234
      %v236 = vrot.slane %v231, %v235
      %v237 = vmul.f32 %v215, %v227
      %v238 = vmul.f32 %v216, %v236
      %239 = vst.msk [vmem:[#allocation7] sm:$0x1] %vm191, %v237
      %240 = vst.msk [vmem:[#allocation7 + $0x1] sm:$0x1] %vm191, %v238
    $region21: #{tpu_custom_call.1} parent=1 // pred_fallthru
      _
    // Predicated region
    $region22: #{tpu_custom_call.1} parent=1 // pred_check
      _
    $region23: #{tpu_custom_call.1} parent=1 // pred_check_branch
      %242 = sbr.rel (0) target = $region25
    $region24: #{tpu_custom_call.1} parent=1 // pred_region
      %s244 = ssub.s32 32, 32
      %245 = vsyncadd [#allocation6], %s244
      %s246 = sshll.u32 [#allocation7], 4
      %s247 = int_to_ptr.vmem [resolvable:$true] %s246
      %252 = dma.vmem_to_hbm [thread:$0]  %s247, 32, %s2, [#allocation6], 16, 16, 1
    $region25: #{tpu_custom_call.1} parent=1 // pred_fallthru
      _
    // Predicated region
    $region26: #{tpu_custom_call.1} parent=1 // pred_check
      _
    $region27: #{tpu_custom_call.1} parent=1 // pred_check_branch
      %254 = sbr.rel (0) target = $region29
    $region28: #{tpu_custom_call.1} parent=1 // pred_region
      %255 = dma.done [#allocation6], 32
    $region29: #{tpu_custom_call.1} parent=1 // pred_fallthru
      _
    %256 = vsyncpa [#allocation5], 1
    %257 = vsyncpa [#allocation6], 1

</llo_original>
